<compile_context>
chip_gen: v6e
topology: v6e:2x2x1
jax: 0.10.0
libtpu: 0.0.40
codegen_flags: <defaults>
</compile_context>

<pallas_src>
import functools

import jax
import jax.numpy as jnp
import numpy as np
from jax.experimental import pallas as pl
from jax.experimental.pallas import tpu as pltpu


def _node_conv_kernel(a_ref, h_ref, c_ref, w_rel_ref, w_root_ref, b_ref, hc_ref):
    """Fused NodeConv step over a row-tile of destination nodes.

    a_ref      : (tile_n, N)  adjacency rows pre-scaled by 1/neighbor_norm (f32)
    h_ref      : (N, D)       full node states (resident; contraction operand)
    c_ref      : (tile_n, D)  cell-state tile
    w_rel_ref  : (D, 4D)      relation weights z|i|f|o, i/f/o columns pre-halved
    w_root_ref : (D, 4D)      root weights, same layout / pre-halving
    b_ref      : (1, 4D)      root biases, i/f/o pre-halved
    hc_ref     : (tile_n, 2D) packed [h_new | c_new] output
    """
    tile_n = a_ref.shape[0]
    n_total, d = h_ref.shape

    # Root-path operand: the rows of h belonging to this tile.  With the default
    # grid=(1,) this is just the whole (resident) h block.
    if n_total == tile_n:
        h_tile = h_ref[...]
    else:
        r0 = pl.multiple_of(pl.program_id(0) * tile_n, tile_n)
        h_tile = h_ref[pl.ds(r0, tile_n), :]

    # Neighborhood aggregation as one MXU matmul with K = N.  Rows of A were
    # pre-scaled by 1/neighbor_norm in the wrapper, so no in-kernel divide.
    agg = jnp.dot(a_ref[...], h_ref[...], preferred_element_type=jnp.float32)

    # Gate pre-activations (z|i|f|o).  The i/f/o parameter columns were pre-halved,
    # so a single full-width tanh implements all four nonlinearities:
    #   z lanes:     tanh(g_z)
    #   i/f/o lanes: sigmoid(g) = 0.5 * tanh(g / 2) + 0.5
    gates = (jnp.dot(agg, w_rel_ref[...], preferred_element_type=jnp.float32)
             + jnp.dot(h_tile, w_root_ref[...], preferred_element_type=jnp.float32)
             + b_ref[...])                                  # (tile_n, 4D)

    t = jnp.tanh(gates)                                     # one 128-lane EUP pass
    z = t[:, 0 * d:1 * d]
    i = 0.5 * t[:, 1 * d:2 * d] + 0.5
    f = 0.5 * t[:, 2 * d:3 * d] + 0.5
    o = 0.5 * t[:, 3 * d:4 * d] + 0.5

    c_new = f * c_ref[...] + i * z
    h_new = o * jnp.tanh(c_new)

    # Single full-block store of the packed [h_new | c_new] slab (one write stream).
    hc_ref[...] = jnp.concatenate([h_new, c_new], axis=-1).astype(hc_ref.dtype)


@functools.partial(jax.jit, static_argnames=("tile_n",))
def node_conv(h, c, adj, neighbor_norm, w_root, w_rel, b, *, tile_n=None):
    """Pallas NodeConv forward.

    h, c          : (N, D) float32
    adj           : (N, N) dense adjacency counts, adj[j, k] = #edges k->j
    neighbor_norm : (N, 1) float32, >= 1 (pass ones for no normalization)
    w_root        : (D, 4D) float32 (z|i|f|o root weights, (in, out) layout)
    w_rel         : (D, 4D) float32 (z|i|f|o relation weights, (in, out) layout)
    b             : (1, 4D) float32 (root biases)
    Returns (h_new, c_new), both (N, D).
    """
    N, D = h.shape
    if tile_n is None:
        # Default: one grid step.  At small N the kernel is latency/step-overhead
        # bound on every TPU generation; splitting only pays off on v7x (2 TCs) once
        # the per-tile compute exceeds the ~600-cycle step overhead.
        tile_n = N
    assert N % tile_n == 0
    grid = (N // tile_n,)

    # Pre-scale adjacency rows (row j = destination node j) by 1/neighbor_norm so the
    # kernel's A @ h matmul directly yields the normalized aggregation.  Kept f32:
    # scaled entries are no longer exact integers, so bf16 would lose precision.
    a_scaled = (adj / neighbor_norm).astype(jnp.float32)

    # Pre-halve the i/f/o gate parameter columns (exact: *0.5) so one in-kernel tanh
    # covers both tanh (z) and sigmoid (i/f/o) via sigmoid(x) = 0.5*tanh(x/2) + 0.5.
    col_scale = jnp.concatenate(
        [jnp.ones((1, D), jnp.float32), jnp.full((1, 3 * D), 0.5, jnp.float32)],
        axis=1)
    w_rel_s = (w_rel * col_scale).astype(jnp.float32)
    w_root_s = (w_root * col_scale).astype(jnp.float32)
    b_s = (b * col_scale).astype(jnp.float32)

    hc = pl.pallas_call(
        _node_conv_kernel,
        out_shape=jax.ShapeDtypeStruct((N, 2 * D), h.dtype),
        grid_spec=pltpu.PrefetchScalarGridSpec(
            num_scalar_prefetch=0,
            grid=grid,
            in_specs=[
                pl.BlockSpec((tile_n, N), lambda i: (i, 0)),   # pre-scaled adjacency rows
                pl.BlockSpec((N, D), lambda i: (0, 0)),        # h (full, resident)
                pl.BlockSpec((tile_n, D), lambda i: (i, 0)),   # c tile
                pl.BlockSpec((D, 4 * D), lambda i: (0, 0)),    # W_rel (pre-scaled)
                pl.BlockSpec((D, 4 * D), lambda i: (0, 0)),    # W_root (pre-scaled)
                pl.BlockSpec((1, 4 * D), lambda i: (0, 0)),    # bias (pre-scaled)
            ],
            out_specs=pl.BlockSpec((tile_n, 2 * D), lambda i: (i, 0)),
        ),
        compiler_params=pltpu.CompilerParams(
            dimension_semantics=(("parallel",) if grid[0] > 1 else ("arbitrary",))),
    )(a_scaled, h, c, w_rel_s, w_root_s, b_s)

    return hc[:, :D], hc[:, D:]


def _reference(h, c, row, col, neighbor_norm, w_root, w_rel, b):
    """Pure-JAX reference mirroring the PyTorch forward."""
    N, D = h.shape
    hp = jax.lax.Precision.HIGHEST
    agg = jnp.zeros_like(h).at[col].add(h[row])
    agg = agg / neighbor_norm
    gates = (jnp.dot(h, w_root, precision=hp)
             + jnp.dot(agg, w_rel, precision=hp) + b)
    z = jnp.tanh(gates[:, 0 * D:1 * D])
    i = jax.nn.sigmoid(gates[:, 1 * D:2 * D])
    f = jax.nn.sigmoid(gates[:, 2 * D:3 * D])
    o = jax.nn.sigmoid(gates[:, 3 * D:4 * D])
    c_new = f * c + i * z
    h_new = o * jnp.tanh(c_new)
    return h_new, c_new


if __name__ == "__main__":
    N, D, E = 128, 32, 512            # nodes, node_dim, edges
    key = jax.random.PRNGKey(0)
    keys = jax.random.split(key, 16)

    h = jax.random.normal(keys[0], (N, D), dtype=jnp.float32)
    c = jax.random.normal(keys[1], (N, D), dtype=jnp.float32)
    row = jax.random.randint(keys[2], (E,), 0, N)
    col = jax.random.randint(keys[3], (E,), 0, N)

    # neighbor_norm: in-degree per destination node, clamped to >= 1
    deg = jnp.zeros((N,), jnp.float32).at[col].add(1.0)
    neighbor_norm = jnp.maximum(deg, 1.0)[:, None]           # (N, 1)

    # Deterministic parameter init (PyTorch nn.Linear-style uniform bound).
    bound = 1.0 / np.sqrt(D)

    def uni(k, shape):
        return jax.random.uniform(k, shape, jnp.float32, -bound, bound)

    # PyTorch Linear stores W as (out, in); we keep them transposed (in, out)
    # and fuse z|i|f|o into one (D, 4D) slab each.
    w_root = jnp.concatenate([uni(keys[4 + g], (D, D)) for g in range(4)], axis=1)
    w_rel = jnp.concatenate([uni(keys[8 + g], (D, D)) for g in range(4)], axis=1)
    b = jnp.concatenate([uni(keys[12 + g], (1, D)) for g in range(4)], axis=1)

    # Dense adjacency: adj[j, k] = number of edges with row=k, col=j so that
    # adj @ h == scatter(h[row], col, reduce='sum').
    adj = jnp.zeros((N, N), jnp.float32).at[col, row].add(1.0)

    h_new, c_new = node_conv(h, c, adj, neighbor_norm, w_root, w_rel, b)
    jax.block_until_ready((h_new, c_new))

    h_ref, c_ref = _reference(h, c, row, col, neighbor_norm, w_root, w_rel, b)
    np.testing.assert_allclose(np.asarray(h_new), np.asarray(h_ref),
                               rtol=1e-5, atol=1e-5)
    np.testing.assert_allclose(np.asarray(c_new), np.asarray(c_ref),
                               rtol=1e-5, atol=1e-5)

    print("KERNEL_OK")
</pallas_src>

<mosaic_0001>
module attributes {stable_mosaic.version = 11 : i64} {
  func.func @_node_conv_kernel(%arg0: i32, %arg1: memref<128x128xf32, #tpu.memory_space<vmem>>, %arg2: memref<128x32xf32, #tpu.memory_space<vmem>>, %arg3: memref<128x32xf32, #tpu.memory_space<vmem>>, %arg4: memref<32x128xf32, #tpu.memory_space<vmem>>, %arg5: memref<32x128xf32, #tpu.memory_space<vmem>>, %arg6: memref<1x128xf32, #tpu.memory_space<vmem>>, %arg7: memref<128x64xf32, #tpu.memory_space<vmem>>) attributes {dimension_semantics = [#tpu.dimension_semantics<arbitrary>], iteration_bounds = array<i64: 1>, scalar_prefetch = 0 : i64, scratch_operands = 0 : i64, tpu.core_type = #tpu.core_type<tc>, window_params = [{transform_indices = @transform_0, window_bounds = array<i64: 128, 128>}, {pipeline_mode = #tpu.pipeline_mode<synchronous>, transform_indices = @transform_1, window_bounds = array<i64: 128, 32>}, {transform_indices = @transform_2, window_bounds = array<i64: 128, 32>}, {pipeline_mode = #tpu.pipeline_mode<synchronous>, transform_indices = @transform_3, window_bounds = array<i64: 32, 128>}, {pipeline_mode = #tpu.pipeline_mode<synchronous>, transform_indices = @transform_4, window_bounds = array<i64: 32, 128>}, {pipeline_mode = #tpu.pipeline_mode<synchronous>, transform_indices = @transform_5, window_bounds = array<i64: 1, 128>}, {transform_indices = @transform_6, window_bounds = array<i64: 128, 64>}]} {
    %c0 = arith.constant 0 : index
    %c0_0 = arith.constant 0 : index
    %0 = vector.load %arg2[%c0, %c0_0] : memref<128x32xf32, #tpu.memory_space<vmem>>, vector<128x32xf32>
    %c0_1 = arith.constant 0 : index
    %c0_2 = arith.constant 0 : index
    %1 = vector.load %arg1[%c0_1, %c0_2] : memref<128x128xf32, #tpu.memory_space<vmem>>, vector<128x128xf32>
    %c0_3 = arith.constant 0 : index
    %c0_4 = arith.constant 0 : index
    %2 = vector.load %arg2[%c0_3, %c0_4] : memref<128x32xf32, #tpu.memory_space<vmem>>, vector<128x32xf32>
    %cst = arith.constant dense<0.000000e+00> : vector<128x32xf32>
    %3 = tpu.matmul %1, %2, %cst {dimension_numbers = #tpu.dot_dimension_numbers<[1], [0], [0], [1], [0, 0, 1, 1], [], []>} : vector<128x128xf32>, vector<128x32xf32>, vector<128x32xf32> -> vector<128x32xf32>
    %c0_5 = arith.constant 0 : index
    %c0_6 = arith.constant 0 : index
    %4 = vector.load %arg4[%c0_5, %c0_6] : memref<32x128xf32, #tpu.memory_space<vmem>>, vector<32x128xf32>
    %cst_7 = arith.constant dense<0.000000e+00> : vector<128x128xf32>
    %5 = tpu.matmul %3, %4, %cst_7 {dimension_numbers = #tpu.dot_dimension_numbers<[1], [0], [0], [1], [0, 0, 1, 1], [], []>} : vector<128x32xf32>, vector<32x128xf32>, vector<128x128xf32> -> vector<128x128xf32>
    %c0_8 = arith.constant 0 : index
    %c0_9 = arith.constant 0 : index
    %6 = vector.load %arg5[%c0_8, %c0_9] : memref<32x128xf32, #tpu.memory_space<vmem>>, vector<32x128xf32>
    %cst_10 = arith.constant dense<0.000000e+00> : vector<128x128xf32>
    %7 = tpu.matmul %0, %6, %cst_10 {dimension_numbers = #tpu.dot_dimension_numbers<[1], [0], [0], [1], [0, 0, 1, 1], [], []>} : vector<128x32xf32>, vector<32x128xf32>, vector<128x128xf32> -> vector<128x128xf32>
    %8 = arith.addf %5, %7 : vector<128x128xf32>
    %c0_11 = arith.constant 0 : index
    %c0_12 = arith.constant 0 : index
    %9 = vector.load %arg6[%c0_11, %c0_12] : memref<1x128xf32, #tpu.memory_space<vmem>>, vector<1x128xf32>
    %10 = vector.broadcast %9 : vector<1x128xf32> to vector<128x128xf32>
    %11 = arith.addf %8, %10 : vector<128x128xf32>
    %12 = math.tanh %11 : vector<128x128xf32>
    %13 = vector.extract_strided_slice %12 {offsets = [0, 0], sizes = [128, 32], strides = [1, 1]} : vector<128x128xf32> to vector<128x32xf32>
    %14 = vector.extract_strided_slice %12 {offsets = [0, 32], sizes = [128, 32], strides = [1, 1]} : vector<128x128xf32> to vector<128x32xf32>
    %cst_13 = arith.constant 5.000000e-01 : f32
    %15 = vector.broadcast %cst_13 : f32 to vector<128x32xf32>
    %16 = arith.mulf %15, %14 : vector<128x32xf32>
    %cst_14 = arith.constant 5.000000e-01 : f32
    %17 = vector.broadcast %cst_14 : f32 to vector<128x32xf32>
    %18 = arith.addf %16, %17 : vector<128x32xf32>
    %19 = vector.extract_strided_slice %12 {offsets = [0, 64], sizes = [128, 32], strides = [1, 1]} : vector<128x128xf32> to vector<128x32xf32>
    %cst_15 = arith.constant 5.000000e-01 : f32
    %20 = vector.broadcast %cst_15 : f32 to vector<128x32xf32>
    %21 = arith.mulf %20, %19 : vector<128x32xf32>
    %cst_16 = arith.constant 5.000000e-01 : f32
    %22 = vector.broadcast %cst_16 : f32 to vector<128x32xf32>
    %23 = arith.addf %21, %22 : vector<128x32xf32>
    %24 = vector.extract_strided_slice %12 {offsets = [0, 96], sizes = [128, 32], strides = [1, 1]} : vector<128x128xf32> to vector<128x32xf32>
    %cst_17 = arith.constant 5.000000e-01 : f32
    %25 = vector.broadcast %cst_17 : f32 to vector<128x32xf32>
    %26 = arith.mulf %25, %24 : vector<128x32xf32>
    %cst_18 = arith.constant 5.000000e-01 : f32
    %27 = vector.broadcast %cst_18 : f32 to vector<128x32xf32>
    %28 = arith.addf %26, %27 : vector<128x32xf32>
    %c0_19 = arith.constant 0 : index
    %c0_20 = arith.constant 0 : index
    %29 = vector.load %arg3[%c0_19, %c0_20] : memref<128x32xf32, #tpu.memory_space<vmem>>, vector<128x32xf32>
    %30 = arith.mulf %23, %29 : vector<128x32xf32>
    %31 = arith.mulf %18, %13 : vector<128x32xf32>
    %32 = arith.addf %30, %31 : vector<128x32xf32>
    %33 = math.tanh %32 : vector<128x32xf32>
    %34 = arith.mulf %28, %33 : vector<128x32xf32>
    %35 = tpu.concatenate %34, %32 in 1 : vector<128x32xf32>, vector<128x32xf32> -> vector<128x64xf32>
    %c0_21 = arith.constant 0 : index
    %c0_22 = arith.constant 0 : index
    %36 = vector.load %arg7[%c0_21, %c0_22] : memref<128x64xf32, #tpu.memory_space<vmem>>, vector<128x64xf32>
    tpu.vector_store %arg7[%c0_21, %c0_22], %35 {strides = array<i32>} : memref<128x64xf32, #tpu.memory_space<vmem>>, vector<128x64xf32>,
    return
  }
  func.func @transform_0(%arg0: i32) -> (i32, i32) {
    %c0_i32 = arith.constant 0 : i32
    %c0_i32_0 = arith.constant 0 : i32
    return %arg0, %c0_i32 : i32, i32
  }
  func.func @transform_1(%arg0: i32) -> (i32, i32) {
    %c0_i32 = arith.constant 0 : i32
    %c0_i32_0 = arith.constant 0 : i32
    %c0_i32_1 = arith.constant 0 : i32
    return %c0_i32, %c0_i32_0 : i32, i32
  }
  func.func @transform_2(%arg0: i32) -> (i32, i32) {
    %c0_i32 = arith.constant 0 : i32
    %c0_i32_0 = arith.constant 0 : i32
    return %arg0, %c0_i32 : i32, i32
  }
  func.func @transform_3(%arg0: i32) -> (i32, i32) {
    %c0_i32 = arith.constant 0 : i32
    %c0_i32_0 = arith.constant 0 : i32
    %c0_i32_1 = arith.constant 0 : i32
    return %c0_i32, %c0_i32_0 : i32, i32
  }
  func.func @transform_4(%arg0: i32) -> (i32, i32) {
    %c0_i32 = arith.constant 0 : i32
    %c0_i32_0 = arith.constant 0 : i32
    %c0_i32_1 = arith.constant 0 : i32
    return %c0_i32, %c0_i32_0 : i32, i32
  }
  func.func @transform_5(%arg0: i32) -> (i32, i32) {
    %c0_i32 = arith.constant 0 : i32
    %c0_i32_0 = arith.constant 0 : i32
    %c0_i32_1 = arith.constant 0 : i32
    return %c0_i32, %c0_i32_0 : i32, i32
  }
  func.func @transform_6(%arg0: i32) -> (i32, i32) {
    %c0_i32 = arith.constant 0 : i32
    %c0_i32_0 = arith.constant 0 : i32
    return %arg0, %c0_i32 : i32, i32
  }
}

</mosaic_0001>

<llo_original>
// kernel: mul.17
$region0: #{mul.17}
  #allocation0 [shape = 's32[1]{0}', space=sflag, size = 0x4, scoped, tag = 'scoped memory for mul.17']
  %s0 = inlined_call_operand.vmem [shape: f32[1,128], index: 0, kind: input, shape index: {}]
  %s1 = inlined_call_operand.vmem [shape: f32[1,128], index: 1, kind: input, shape index: {}]
  %s2 = inlined_call_operand.vmem [shape: f32[1,128], index: 2, kind: output, shape index: {}]
  %v3 = vld [vmem:[%s0] sm:$0x1]
  %v4 = vld [vmem:[%s1] sm:$0x1]
  %5 = xla_tuple %v3, %v4
  %6 = xla_tuple %5
  %v7 = vmul.f32 %v3, %v4
  %8 = xla_tuple %v7
  %9 = vst [vmem:[%s2] sm:$0x1] %v7

// kernel: node_conv.1
$region0: #{node_conv.1}
  #allocation0 [shape = 'u32[]', space=smem, size = 0x4, offset = 0x4, fixed_abs, tag = 'smem constant byte address 0x4 - core index']
  #allocation1 [shape = 'u32[144,128]{1,0:T(1,128)}', space=vmem, size = 0x12000, scoped, tag = 'internal scratch']
  %s0 = inlined_call_operand.vmem [shape: f32[128,128], index: 0, kind: input, shape index: {}]
  %s1 = inlined_call_operand.vmem [shape: f32[128,32], index: 1, kind: input, shape index: {}]
  %s2 = inlined_call_operand.vmem [shape: f32[128,32], index: 2, kind: input, shape index: {}]
  %s3 = inlined_call_operand.vmem [shape: f32[32,128], index: 3, kind: input, shape index: {}]
  %s4 = inlined_call_operand.vmem [shape: f32[32,128], index: 4, kind: input, shape index: {}]
  %s5 = inlined_call_operand.vmem [shape: f32[1,128], index: 5, kind: input, shape index: {}]
  %s6 = inlined_call_operand.vmem [shape: f32[128,64], index: 6, kind: output, shape index: {}]
  %s7 = sld [smem:[#allocation0]]
  $region34: #{node_conv.1} parent=0
    _
  %s9 = ssub.s32 1, %s7
  %s10 = scalar_select 0, %s9, %s7
  // Predicated region
  $region2: #{node_conv.1} parent=0 // pred_check
    _
  $region3: #{node_conv.1} parent=0 // pred_check_branch
    %12 = sbr.rel (0) target = $region5
  $region4: #{node_conv.1} parent=0 // pred_region
    _
  $region5: #{node_conv.1} parent=0 // pred_fallthru
    _
  // Predicated region
  $region6: #{node_conv.1} parent=0 // pred_check
    _
  $region7: #{node_conv.1} parent=0 // pred_check_branch
    %14 = sbr.rel (0) target = $region9
  $region8: #{node_conv.1} parent=0 // pred_region
    _
  $region9: #{node_conv.1} parent=0 // pred_fallthru
    _
  // Predicated region
  $region10: #{node_conv.1} parent=0 // pred_check
    _
  $region11: #{node_conv.1} parent=0 // pred_check_branch
    %16 = sbr.rel (0) target = $region13
  $region12: #{node_conv.1} parent=0 // pred_region
    _
  $region13: #{node_conv.1} parent=0 // pred_fallthru
    _
  // Predicated region
  $region14: #{node_conv.1} parent=0 // pred_check
    _
  $region15: #{node_conv.1} parent=0 // pred_check_branch
    %18 = sbr.rel (0) target = $region17
  $region16: #{node_conv.1} parent=0 // pred_region
    _
  $region17: #{node_conv.1} parent=0 // pred_fallthru
    _
  // Predicated region
  $region18: #{node_conv.1} parent=0 // pred_check
    _
  $region19: #{node_conv.1} parent=0 // pred_check_branch
    %20 = sbr.rel (0) target = $region21
  $region20: #{node_conv.1} parent=0 // pred_region
    _
  $region21: #{node_conv.1} parent=0 // pred_fallthru
    _
  // Predicated region
  $region22: #{node_conv.1} parent=0 // pred_check
    _
  $region23: #{node_conv.1} parent=0 // pred_check_branch
    %22 = sbr.rel (0) target = $region25
  $region24: #{node_conv.1} parent=0 // pred_region
    _
  $region25: #{node_conv.1} parent=0 // pred_fallthru
    _
  %v23 = vld [vmem:[%s1] sm:$0xff]
  %v24 = vld [vmem:[%s1 + $0x8] sm:$0xff]
  %v25 = vld [vmem:[%s1 + $0x10] sm:$0xff]
  %v26 = vld [vmem:[%s1 + $0x18] sm:$0xff]
  %v27 = vld [vmem:[%s1 + $0x20] sm:$0xff]
  %v28 = vld [vmem:[%s1 + $0x28] sm:$0xff]
  %v29 = vld [vmem:[%s1 + $0x30] sm:$0xff]
  %v30 = vld [vmem:[%s1 + $0x38] sm:$0xff]
  %v31 = vld [vmem:[%s1 + $0x40] sm:$0xff]
  %v32 = vld [vmem:[%s1 + $0x48] sm:$0xff]
  %v33 = vld [vmem:[%s1 + $0x50] sm:$0xff]
  %v34 = vld [vmem:[%s1 + $0x58] sm:$0xff]
  %v35 = vld [vmem:[%s1 + $0x60] sm:$0xff]
  %v36 = vld [vmem:[%s1 + $0x68] sm:$0xff]
  %v37 = vld [vmem:[%s1 + $0x70] sm:$0xff]
  %v38 = vld [vmem:[%s1 + $0x78] sm:$0xff]
  %v39 = vld [vmem:[%s0] sm:$0xff]
  %v40 = vld [vmem:[%s0 + $0x8] sm:$0xff]
  %v41 = vld [vmem:[%s0 + $0x10] sm:$0xff]
  %v42 = vld [vmem:[%s0 + $0x18] sm:$0xff]
  %v43 = vld [vmem:[%s0 + $0x20] sm:$0xff]
  %v44 = vld [vmem:[%s0 + $0x28] sm:$0xff]
  %v45 = vld [vmem:[%s0 + $0x30] sm:$0xff]
  %v46 = vld [vmem:[%s0 + $0x38] sm:$0xff]
  %v47 = vld [vmem:[%s0 + $0x40] sm:$0xff]
  %v48 = vld [vmem:[%s0 + $0x48] sm:$0xff]
  %v49 = vld [vmem:[%s0 + $0x50] sm:$0xff]
  %v50 = vld [vmem:[%s0 + $0x58] sm:$0xff]
  %v51 = vld [vmem:[%s0 + $0x60] sm:$0xff]
  %v52 = vld [vmem:[%s0 + $0x68] sm:$0xff]
  %v53 = vld [vmem:[%s0 + $0x70] sm:$0xff]
  %v54 = vld [vmem:[%s0 + $0x78] sm:$0xff]
  %55 = vmatprep.subr.mxu0 0.0
  %56 = vmatpush1.msra.mxu0 %v38
  %57 = vmatprep.subr.mxu0 0.0
  %58 = vmatpush1.msra.mxu0 %v37
  %59 = vmatprep.subr.mxu0 0.0
  %60 = vmatpush1.msra.mxu0 %v36
  %61 = vmatprep.subr.mxu0 0.0
  %62 = vmatpush1.msra.mxu0 %v35
  %63 = vmatprep.subr.mxu0 0.0
  %64 = vmatpush1.msra.mxu0 %v34
  %65 = vmatprep.subr.mxu0 0.0
  %66 = vmatpush1.msra.mxu0 %v33
  %67 = vmatprep.subr.mxu0 0.0
  %68 = vmatpush1.msra.mxu0 %v32
  %69 = vmatprep.subr.mxu0 0.0
  %70 = vmatpush1.msra.mxu0 %v31
  %71 = vmatprep.subr.mxu0 0.0
  %72 = vmatpush1.msra.mxu0 %v30
  %73 = vmatprep.subr.mxu0 0.0
  %74 = vmatpush1.msra.mxu0 %v29
  %75 = vmatprep.subr.mxu0 0.0
  %76 = vmatpush1.msra.mxu0 %v28
  %77 = vmatprep.subr.mxu0 0.0
  %78 = vmatpush1.msra.mxu0 %v27
  %79 = vmatprep.subr.mxu0 0.0
  %80 = vmatpush1.msra.mxu0 %v26
  %81 = vmatprep.subr.mxu0 0.0
  %82 = vmatpush1.msra.mxu0 %v25
  %83 = vmatprep.subr.mxu0 0.0
  %84 = vmatpush1.msra.mxu0 %v24
  %85 = vmatprep.subr.mxu0 0.0
  %86 = vmatpush1.msra.mxu0 %v23
  %87 = vmatprep.subr.mxu0 0.0
  %88 = vmatpush2.msra.mxu0 0.0
  %89 = vmatprep.subr.mxu0 0.0
  %90 = vmatpush2.msra.mxu0 0.0
  %91 = vmatprep.subr.mxu0 0.0
  %92 = vmatpush2.msra.mxu0 0.0
  %93 = vmatprep.subr.mxu0 0.0
  %94 = vmatpush2.msra.mxu0 0.0
  %95 = vmatprep.subr.mxu0 0.0
  %96 = vmatpush2.msra.mxu0 0.0
  %97 = vmatprep.subr.mxu0 0.0
  %98 = vmatpush2.msra.mxu0 0.0
  %99 = vmatprep.subr.mxu0 0.0
  %100 = vmatpush2.msra.mxu0 0.0
  %101 = vmatprep.subr.mxu0 0.0
  %102 = vmatpush2.msra.mxu0 0.0
  %103 = vmatprep.subr.mxu0 0.0
  %104 = vmatpush2.msra.mxu0 0.0
  %105 = vmatprep.subr.mxu0 0.0
  %106 = vmatpush2.msra.mxu0 0.0
  %107 = vmatprep.subr.mxu0 0.0
  %108 = vmatpush2.msra.mxu0 0.0
  %109 = vmatprep.subr.mxu0 0.0
  %110 = vmatpush2.msra.mxu0 0.0
  %111 = vmatprep.subr.mxu0 0.0
  %112 = vmatpush2.msra.mxu0 0.0
  %113 = vmatprep.subr.mxu0 0.0
  %114 = vmatpush2.msra.mxu0 0.0
  %115 = vmatprep.subr.mxu0 0.0
  %116 = vmatpush2.msra.mxu0 0.0
  %117 = vmatprep.subr.mxu0 0.0
  %118 = vmatpush2.msra.mxu0 0.0
  %119 = vmatprep.mubr.f32.mxu0 0.0
  %120 = vmatmul.mubr.f32.gmra.mxu0 %v39
  %v121 = vpop.f32.mrf.mxu0
  %v122 = vadd.f32 0.0, %v121
  %v123 = vpop.f32.mrf.mxu0
  %124 = vmatprep.mubr.f32.mxu0 0.0
  %125 = vmatmul.mubr.f32.gmra.mxu0 %v40
  %v126 = vpop.f32.mrf.mxu0
  %v127 = vadd.f32 0.0, %v126
  %v128 = vpop.f32.mrf.mxu0
  %129 = vmatprep.mubr.f32.mxu0 0.0
  %130 = vmatmul.mubr.f32.gmra.mxu0 %v41
  %v131 = vpop.f32.mrf.mxu0
  %v132 = vadd.f32 0.0, %v131
  %v133 = vpop.f32.mrf.mxu0
  %134 = vmatprep.mubr.f32.mxu0 0.0
  %135 = vmatmul.mubr.f32.gmra.mxu0 %v42
  %v136 = vpop.f32.mrf.mxu0
  %v137 = vadd.f32 0.0, %v136
  %v138 = vpop.f32.mrf.mxu0
  %139 = vmatprep.mubr.f32.mxu0 0.0
  %140 = vmatmul.mubr.f32.gmra.mxu0 %v43
  %v141 = vpop.f32.mrf.mxu0
  %v142 = vadd.f32 0.0, %v141
  %v143 = vpop.f32.mrf.mxu0
  %144 = vmatprep.mubr.f32.mxu0 0.0
  %145 = vmatmul.mubr.f32.gmra.mxu0 %v44
  %v146 = vpop.f32.mrf.mxu0
  %v147 = vadd.f32 0.0, %v146
  %v148 = vpop.f32.mrf.mxu0
  %149 = vmatprep.mubr.f32.mxu0 0.0
  %150 = vmatmul.mubr.f32.gmra.mxu0 %v45
  %v151 = vpop.f32.mrf.mxu0
  %v152 = vadd.f32 0.0, %v151
  %v153 = vpop.f32.mrf.mxu0
  %154 = vmatprep.mubr.f32.mxu0 0.0
  %155 = vmatmul.mubr.f32.gmra.mxu0 %v46
  %v156 = vpop.f32.mrf.mxu0
  %v157 = vadd.f32 0.0, %v156
  %v158 = vpop.f32.mrf.mxu0
  %159 = vmatprep.mubr.f32.mxu0 0.0
  %160 = vmatmul.mubr.f32.gmra.mxu0 %v47
  %v161 = vpop.f32.mrf.mxu0
  %v162 = vadd.f32 0.0, %v161
  %v163 = vpop.f32.mrf.mxu0
  %164 = vmatprep.mubr.f32.mxu0 0.0
  %165 = vmatmul.mubr.f32.gmra.mxu0 %v48
  %v166 = vpop.f32.mrf.mxu0
  %v167 = vadd.f32 0.0, %v166
  %v168 = vpop.f32.mrf.mxu0
  %169 = vmatprep.mubr.f32.mxu0 0.0
  %170 = vmatmul.mubr.f32.gmra.mxu0 %v49
  %v171 = vpop.f32.mrf.mxu0
  %v172 = vadd.f32 0.0, %v171
  %v173 = vpop.f32.mrf.mxu0
  %174 = vmatprep.mubr.f32.mxu0 0.0
  %175 = vmatmul.mubr.f32.gmra.mxu0 %v50
  %v176 = vpop.f32.mrf.mxu0
  %v177 = vadd.f32 0.0, %v176
  %v178 = vpop.f32.mrf.mxu0
  %179 = vmatprep.mubr.f32.mxu0 0.0
  %180 = vmatmul.mubr.f32.gmra.mxu0 %v51
  %v181 = vpop.f32.mrf.mxu0
  %v182 = vadd.f32 0.0, %v181
  %v183 = vpop.f32.mrf.mxu0
  %184 = vmatprep.mubr.f32.mxu0 0.0
  %185 = vmatmul.mubr.f32.gmra.mxu0 %v52
  %v186 = vpop.f32.mrf.mxu0
  %v187 = vadd.f32 0.0, %v186
  %v188 = vpop.f32.mrf.mxu0
  %189 = vmatprep.mubr.f32.mxu0 0.0
  %190 = vmatmul.mubr.f32.gmra.mxu0 %v53
  %v191 = vpop.f32.mrf.mxu0
  %v192 = vadd.f32 0.0, %v191
  %v193 = vpop.f32.mrf.mxu0
  %194 = vmatprep.mubr.f32.mxu0 0.0
  %195 = vmatmul.mubr.f32.gmra.mxu0 %v54
  %v196 = vpop.f32.mrf.mxu0
  %v197 = vadd.f32 0.0, %v196
  %v198 = vpop.f32.mrf.mxu0
  %199 = vdwg.mxu0
  %v200 = vld [vmem:[%s3] sm:$0xff]
  %v201 = vld [vmem:[%s3 + $0x8] sm:$0xff]
  %v202 = vld [vmem:[%s3 + $0x10] sm:$0xff]
  %v203 = vld [vmem:[%s3 + $0x18] sm:$0xff]
  %v204 = vld [vmem:[%s4] sm:$0xff]
  %v205 = vld [vmem:[%s4 + $0x8] sm:$0xff]
  %v206 = vld [vmem:[%s4 + $0x10] sm:$0xff]
  %v207 = vld [vmem:[%s4 + $0x18] sm:$0xff]
  %vm208 = vcmask 261120
  %v210 = vsel %vm208, %v23, 0
  %v213 = vsel %vm208, %v24, 0
  %v216 = vsel %vm208, %v25, 0
  %v219 = vsel %vm208, %v26, 0
  %v222 = vsel %vm208, %v27, 0
  %v225 = vsel %vm208, %v28, 0
  %v228 = vsel %vm208, %v29, 0
  %v231 = vsel %vm208, %v30, 0
  %v234 = vsel %vm208, %v31, 0
  %v237 = vsel %vm208, %v32, 0
  %v240 = vsel %vm208, %v33, 0
  %v243 = vsel %vm208, %v34, 0
  %v246 = vsel %vm208, %v35, 0
  %v249 = vsel %vm208, %v36, 0
  %v252 = vsel %vm208, %v37, 0
  %v255 = vsel %vm208, %v38, 0
  %257 = vmatprep.subr.mxu0 0.0
  %258 = vmatpush1.msra.mxu0 0.0
  %259 = vmatprep.subr.mxu0 0.0
  %260 = vmatpush1.msra.mxu0 0.0
  %261 = vmatprep.subr.mxu0 0.0
  %262 = vmatpush1.msra.mxu0 0.0
  %263 = vmatprep.subr.mxu0 0.0
  %264 = vmatpush1.msra.mxu0 0.0
  %265 = vmatprep.subr.mxu0 0.0
  %266 = vmatpush1.msra.mxu0 0.0
  %267 = vmatprep.subr.mxu0 0.0
  %268 = vmatpush1.msra.mxu0 0.0
  %269 = vmatprep.subr.mxu0 0.0
  %270 = vmatpush1.msra.mxu0 0.0
  %271 = vmatprep.subr.mxu0 0.0
  %272 = vmatpush1.msra.mxu0 0.0
  %273 = vmatprep.subr.mxu0 0.0
  %274 = vmatpush1.msra.mxu0 0.0
  %275 = vmatprep.subr.mxu0 0.0
  %276 = vmatpush1.msra.mxu0 0.0
  %277 = vmatprep.subr.mxu0 0.0
  %278 = vmatpush1.msra.mxu0 0.0
  %279 = vmatprep.subr.mxu0 0.0
  %280 = vmatpush1.msra.mxu0 0.0
  %281 = vmatprep.subr.mxu0 0.0
  %282 = vmatpush1.msra.mxu0 %v207
  %283 = vmatprep.subr.mxu0 0.0
  %284 = vmatpush1.msra.mxu0 %v206
  %285 = vmatprep.subr.mxu0 0.0
  %286 = vmatpush1.msra.mxu0 %v205
  %287 = vmatprep.subr.mxu0 0.0
  %288 = vmatpush1.msra.mxu0 %v204
  %289 = vmatprep.subr.mxu0 0.0
  %290 = vmatpush2.msra.mxu0 0.0
  %291 = vmatprep.subr.mxu0 0.0
  %292 = vmatpush2.msra.mxu0 0.0
  %293 = vmatprep.subr.mxu0 0.0
  %294 = vmatpush2.msra.mxu0 0.0
  %295 = vmatprep.subr.mxu0 0.0
  %296 = vmatpush2.msra.mxu0 0.0
  %297 = vmatprep.subr.mxu0 0.0
  %298 = vmatpush2.msra.mxu0 0.0
  %299 = vmatprep.subr.mxu0 0.0
  %300 = vmatpush2.msra.mxu0 0.0
  %301 = vmatprep.subr.mxu0 0.0
  %302 = vmatpush2.msra.mxu0 0.0
  %303 = vmatprep.subr.mxu0 0.0
  %304 = vmatpush2.msra.mxu0 0.0
  %305 = vmatprep.subr.mxu0 0.0
  %306 = vmatpush2.msra.mxu0 0.0
  %307 = vmatprep.subr.mxu0 0.0
  %308 = vmatpush2.msra.mxu0 0.0
  %309 = vmatprep.subr.mxu0 0.0
  %310 = vmatpush2.msra.mxu0 0.0
  %311 = vmatprep.subr.mxu0 0.0
  %312 = vmatpush2.msra.mxu0 0.0
  %313 = vmatprep.subr.mxu0 0.0
  %314 = vmatpush2.msra.mxu0 0.0
  %315 = vmatprep.subr.mxu0 0.0
  %316 = vmatpush2.msra.mxu0 0.0
  %317 = vmatprep.subr.mxu0 0.0
  %318 = vmatpush2.msra.mxu0 0.0
  %319 = vmatprep.subr.mxu0 0.0
  %320 = vmatpush2.msra.mxu0 0.0
  %321 = vmatprep.mubr.f32.mxu0 0.0
  %322 = vmatmul.mubr.f32.gmra.mxu0 %v210
  %v323 = vpop.f32.mrf.mxu0
  %v324 = vadd.f32 0.0, %v323
  %v325 = vpop.f32.mrf.mxu0
  %326 = vmatprep.mubr.f32.mxu0 0.0
  %327 = vmatmul.mubr.f32.gmra.mxu0 %v213
  %v328 = vpop.f32.mrf.mxu0
  %v329 = vadd.f32 0.0, %v328
  %v330 = vpop.f32.mrf.mxu0
  %331 = vmatprep.mubr.f32.mxu0 0.0
  %332 = vmatmul.mubr.f32.gmra.mxu0 %v216
  %v333 = vpop.f32.mrf.mxu0
  %v334 = vadd.f32 0.0, %v333
  %v335 = vpop.f32.mrf.mxu0
  %336 = vmatprep.mubr.f32.mxu0 0.0
  %337 = vmatmul.mubr.f32.gmra.mxu0 %v219
  %v338 = vpop.f32.mrf.mxu0
  %v339 = vadd.f32 0.0, %v338
  %v340 = vpop.f32.mrf.mxu0
  %341 = vmatprep.mubr.f32.mxu0 0.0
  %342 = vmatmul.mubr.f32.gmra.mxu0 %v222
  %v343 = vpop.f32.mrf.mxu0
  %v344 = vadd.f32 0.0, %v343
  %v345 = vpop.f32.mrf.mxu0
  %346 = vmatprep.mubr.f32.mxu0 0.0
  %347 = vmatmul.mubr.f32.gmra.mxu0 %v225
  %v348 = vpop.f32.mrf.mxu0
  %v349 = vadd.f32 0.0, %v348
  %v350 = vpop.f32.mrf.mxu0
  %351 = vmatprep.mubr.f32.mxu0 0.0
  %352 = vmatmul.mubr.f32.gmra.mxu0 %v228
  %v353 = vpop.f32.mrf.mxu0
  %v354 = vadd.f32 0.0, %v353
  %v355 = vpop.f32.mrf.mxu0
  %356 = vmatprep.mubr.f32.mxu0 0.0
  %357 = vmatmul.mubr.f32.gmra.mxu0 %v231
  %v358 = vpop.f32.mrf.mxu0
  %v359 = vadd.f32 0.0, %v358
  %v360 = vpop.f32.mrf.mxu0
  %361 = vmatprep.mubr.f32.mxu0 0.0
  %362 = vmatmul.mubr.f32.gmra.mxu0 %v234
  %v363 = vpop.f32.mrf.mxu0
  %v364 = vadd.f32 0.0, %v363
  %v365 = vpop.f32.mrf.mxu0
  %366 = vmatprep.mubr.f32.mxu0 0.0
  %367 = vmatmul.mubr.f32.gmra.mxu0 %v237
  %v368 = vpop.f32.mrf.mxu0
  %v369 = vadd.f32 0.0, %v368
  %v370 = vpop.f32.mrf.mxu0
  %371 = vmatprep.mubr.f32.mxu0 0.0
  %372 = vmatmul.mubr.f32.gmra.mxu0 %v240
  %v373 = vpop.f32.mrf.mxu0
  %v374 = vadd.f32 0.0, %v373
  %v375 = vpop.f32.mrf.mxu0
  %376 = vmatprep.mubr.f32.mxu0 0.0
  %377 = vmatmul.mubr.f32.gmra.mxu0 %v243
  %v378 = vpop.f32.mrf.mxu0
  %v379 = vadd.f32 0.0, %v378
  %v380 = vpop.f32.mrf.mxu0
  %381 = vmatprep.mubr.f32.mxu0 0.0
  %382 = vmatmul.mubr.f32.gmra.mxu0 %v246
  %v383 = vpop.f32.mrf.mxu0
  %v384 = vadd.f32 0.0, %v383
  %v385 = vpop.f32.mrf.mxu0
  %386 = vmatprep.mubr.f32.mxu0 0.0
  %387 = vmatmul.mubr.f32.gmra.mxu0 %v249
  %v388 = vpop.f32.mrf.mxu0
  %v389 = vadd.f32 0.0, %v388
  %v390 = vpop.f32.mrf.mxu0
  %391 = vmatprep.mubr.f32.mxu0 0.0
  %392 = vmatmul.mubr.f32.gmra.mxu0 %v252
  %v393 = vpop.f32.mrf.mxu0
  %v394 = vadd.f32 0.0, %v393
  %v395 = vpop.f32.mrf.mxu0
  %396 = vmatprep.mubr.f32.mxu0 0.0
  %397 = vmatmul.mubr.f32.gmra.mxu0 %v255
  %v398 = vpop.f32.mrf.mxu0
  %v399 = vadd.f32 0.0, %v398
  %v400 = vpop.f32.mrf.mxu0
  %401 = vdwg.mxu0
  %v403 = vsel %vm208, %v122, 0
  %v406 = vsel %vm208, %v127, 0
  %v409 = vsel %vm208, %v132, 0
  %v412 = vsel %vm208, %v137, 0
  %v415 = vsel %vm208, %v142, 0
  %v418 = vsel %vm208, %v147, 0
  %v421 = vsel %vm208, %v152, 0
  %v424 = vsel %vm208, %v157, 0
  %v427 = vsel %vm208, %v162, 0
  %v430 = vsel %vm208, %v167, 0
  %v433 = vsel %vm208, %v172, 0
  %v436 = vsel %vm208, %v177, 0
  %v439 = vsel %vm208, %v182, 0
  %v442 = vsel %vm208, %v187, 0
  %v445 = vsel %vm208, %v192, 0
  %v448 = vsel %vm208, %v197, 0
  %450 = vmatprep.subr.mxu0 0.0
  %451 = vmatpush1.msra.mxu0 0.0
  %452 = vmatprep.subr.mxu0 0.0
  %453 = vmatpush1.msra.mxu0 0.0
  %454 = vmatprep.subr.mxu0 0.0
  %455 = vmatpush1.msra.mxu0 0.0
  %456 = vmatprep.subr.mxu0 0.0
  %457 = vmatpush1.msra.mxu0 0.0
  %458 = vmatprep.subr.mxu0 0.0
  %459 = vmatpush1.msra.mxu0 0.0
  %460 = vmatprep.subr.mxu0 0.0
  %461 = vmatpush1.msra.mxu0 0.0
  %462 = vmatprep.subr.mxu0 0.0
  %463 = vmatpush1.msra.mxu0 0.0
  %464 = vmatprep.subr.mxu0 0.0
  %465 = vmatpush1.msra.mxu0 0.0
  %466 = vmatprep.subr.mxu0 0.0
  %467 = vmatpush1.msra.mxu0 0.0
  %468 = vmatprep.subr.mxu0 0.0
  %469 = vmatpush1.msra.mxu0 0.0
  %470 = vmatprep.subr.mxu0 0.0
  %471 = vmatpush1.msra.mxu0 0.0
  %472 = vmatprep.subr.mxu0 0.0
  %473 = vmatpush1.msra.mxu0 0.0
  %474 = vmatprep.subr.mxu0 0.0
  %475 = vmatpush1.msra.mxu0 %v203
  %476 = vmatprep.subr.mxu0 0.0
  %477 = vmatpush1.msra.mxu0 %v202
  %478 = vmatprep.subr.mxu0 0.0
  %479 = vmatpush1.msra.mxu0 %v201
  %480 = vmatprep.subr.mxu0 0.0
  %481 = vmatpush1.msra.mxu0 %v200
  %482 = vmatprep.subr.mxu0 0.0
  %483 = vmatpush2.msra.mxu0 0.0
  %484 = vmatprep.subr.mxu0 0.0
  %485 = vmatpush2.msra.mxu0 0.0
  %486 = vmatprep.subr.mxu0 0.0
  %487 = vmatpush2.msra.mxu0 0.0
  %488 = vmatprep.subr.mxu0 0.0
  %489 = vmatpush2.msra.mxu0 0.0
  %490 = vmatprep.subr.mxu0 0.0
  %491 = vmatpush2.msra.mxu0 0.0
  %492 = vmatprep.subr.mxu0 0.0
  %493 = vmatpush2.msra.mxu0 0.0
  %494 = vmatprep.subr.mxu0 0.0
  %495 = vmatpush2.msra.mxu0 0.0
  %496 = vmatprep.subr.mxu0 0.0
  %497 = vmatpush2.msra.mxu0 0.0
  %498 = vmatprep.subr.mxu0 0.0
  %499 = vmatpush2.msra.mxu0 0.0
  %500 = vmatprep.subr.mxu0 0.0
  %501 = vmatpush2.msra.mxu0 0.0
  %502 = vmatprep.subr.mxu0 0.0
  %503 = vmatpush2.msra.mxu0 0.0
  %504 = vmatprep.subr.mxu0 0.0
  %505 = vmatpush2.msra.mxu0 0.0
  %506 = vmatprep.subr.mxu0 0.0
  %507 = vmatpush2.msra.mxu0 0.0
  %508 = vmatprep.subr.mxu0 0.0
  %509 = vmatpush2.msra.mxu0 0.0
  %510 = vmatprep.subr.mxu0 0.0
  %511 = vmatpush2.msra.mxu0 0.0
  %512 = vmatprep.subr.mxu0 0.0
  %513 = vmatpush2.msra.mxu0 0.0
  %514 = vmatprep.mubr.f32.mxu0 0.0
  %515 = vmatmul.mubr.f32.gmra.mxu0 %v403
  %v516 = vpop.f32.mrf.mxu0
  %v517 = vadd.f32 %v324, %v516
  %v518 = vpop.f32.mrf.mxu0
  %519 = vmatprep.mubr.f32.mxu0 0.0
  %520 = vmatmul.mubr.f32.gmra.mxu0 %v406
  %v521 = vpop.f32.mrf.mxu0
  %v522 = vadd.f32 %v329, %v521
  %v523 = vpop.f32.mrf.mxu0
  %524 = vmatprep.mubr.f32.mxu0 0.0
  %525 = vmatmul.mubr.f32.gmra.mxu0 %v409
  %v526 = vpop.f32.mrf.mxu0
  %v527 = vadd.f32 %v334, %v526
  %v528 = vpop.f32.mrf.mxu0
  %529 = vmatprep.mubr.f32.mxu0 0.0
  %530 = vmatmul.mubr.f32.gmra.mxu0 %v412
  %v531 = vpop.f32.mrf.mxu0
  %v532 = vadd.f32 %v339, %v531
  %v533 = vpop.f32.mrf.mxu0
  %534 = vmatprep.mubr.f32.mxu0 0.0
  %535 = vmatmul.mubr.f32.gmra.mxu0 %v415
  %v536 = vpop.f32.mrf.mxu0
  %v537 = vadd.f32 %v344, %v536
  %v538 = vpop.f32.mrf.mxu0
  %539 = vmatprep.mubr.f32.mxu0 0.0
  %540 = vmatmul.mubr.f32.gmra.mxu0 %v418
  %v541 = vpop.f32.mrf.mxu0
  %v542 = vadd.f32 %v349, %v541
  %v543 = vpop.f32.mrf.mxu0
  %544 = vmatprep.mubr.f32.mxu0 0.0
  %545 = vmatmul.mubr.f32.gmra.mxu0 %v421
  %v546 = vpop.f32.mrf.mxu0
  %v547 = vadd.f32 %v354, %v546
  %v548 = vpop.f32.mrf.mxu0
  %549 = vmatprep.mubr.f32.mxu0 0.0
  %550 = vmatmul.mubr.f32.gmra.mxu0 %v424
  %v551 = vpop.f32.mrf.mxu0
  %v552 = vadd.f32 %v359, %v551
  %v553 = vpop.f32.mrf.mxu0
  %554 = vmatprep.mubr.f32.mxu0 0.0
  %555 = vmatmul.mubr.f32.gmra.mxu0 %v427
  %v556 = vpop.f32.mrf.mxu0
  %v557 = vadd.f32 %v364, %v556
  %v558 = vpop.f32.mrf.mxu0
  %559 = vmatprep.mubr.f32.mxu0 0.0
  %560 = vmatmul.mubr.f32.gmra.mxu0 %v430
  %v561 = vpop.f32.mrf.mxu0
  %v562 = vadd.f32 %v369, %v561
  %v563 = vpop.f32.mrf.mxu0
  %564 = vmatprep.mubr.f32.mxu0 0.0
  %565 = vmatmul.mubr.f32.gmra.mxu0 %v433
  %v566 = vpop.f32.mrf.mxu0
  %v567 = vadd.f32 %v374, %v566
  %v568 = vpop.f32.mrf.mxu0
  %569 = vmatprep.mubr.f32.mxu0 0.0
  %570 = vmatmul.mubr.f32.gmra.mxu0 %v436
  %v571 = vpop.f32.mrf.mxu0
  %v572 = vadd.f32 %v379, %v571
  %v573 = vpop.f32.mrf.mxu0
  %574 = vmatprep.mubr.f32.mxu0 0.0
  %575 = vmatmul.mubr.f32.gmra.mxu0 %v439
  %v576 = vpop.f32.mrf.mxu0
  %v577 = vadd.f32 %v384, %v576
  %v578 = vpop.f32.mrf.mxu0
  %579 = vmatprep.mubr.f32.mxu0 0.0
  %580 = vmatmul.mubr.f32.gmra.mxu0 %v442
  %v581 = vpop.f32.mrf.mxu0
  %v582 = vadd.f32 %v389, %v581
  %v583 = vpop.f32.mrf.mxu0
  %584 = vmatprep.mubr.f32.mxu0 0.0
  %585 = vmatmul.mubr.f32.gmra.mxu0 %v445
  %v586 = vpop.f32.mrf.mxu0
  %v587 = vadd.f32 %v394, %v586
  %v588 = vpop.f32.mrf.mxu0
  %589 = vmatprep.mubr.f32.mxu0 0.0
  %590 = vmatmul.mubr.f32.gmra.mxu0 %v448
  %v591 = vpop.f32.mrf.mxu0
  %v592 = vadd.f32 %v399, %v591
  %v593 = vpop.f32.mrf.mxu0
  %594 = vdwg.mxu0
  %v595 = vld [vmem:[%s5] sm:$0x1]
  %v597 = vlaneseq
  %v598 = vshrl.u32 %v597, 7
  %v599 = vsub.s32 0, %v598
  %v600 = vrot.slane %v595, %v599
  %v602 = vadd.f32 %v517, %v600
  %v603 = vadd.f32 %v522, %v600
  %v604 = vadd.f32 %v527, %v600
  %v605 = vadd.f32 %v532, %v600
  %v606 = vadd.f32 %v537, %v600
  %v607 = vadd.f32 %v542, %v600
  %v608 = vadd.f32 %v547, %v600
  %v609 = vadd.f32 %v552, %v600
  %v610 = vadd.f32 %v557, %v600
  %v611 = vadd.f32 %v562, %v600
  %v612 = vadd.f32 %v567, %v600
  %v613 = vadd.f32 %v572, %v600
  %v614 = vadd.f32 %v577, %v600
  %v615 = vadd.f32 %v582, %v600
  %v616 = vadd.f32 %v587, %v600
  %v617 = vadd.f32 %v592, %v600
  %v618 = vtanh.pop %v602
  %v619 = vtanh.pop %v603
  %v620 = vtanh.pop %v604
  %v621 = vtanh.pop %v605
  %v622 = vtanh.pop %v606
  %v623 = vtanh.pop %v607
  %v624 = vtanh.pop %v608
  %v625 = vtanh.pop %v609
  %v626 = vtanh.pop %v610
  %v627 = vtanh.pop %v611
  %v628 = vtanh.pop %v612
  %v629 = vtanh.pop %v613
  %v630 = vtanh.pop %v614
  %v631 = vtanh.pop %v615
  %v632 = vtanh.pop %v616
  %v633 = vtanh.pop %v617
  %v634 = vmul.f32 %v618, 0.5
  %v635 = vmul.f32 %v619, 0.5
  %v636 = vmul.f32 %v620, 0.5
  %v637 = vmul.f32 %v621, 0.5
  %v638 = vmul.f32 %v622, 0.5
  %v639 = vmul.f32 %v623, 0.5
  %v640 = vmul.f32 %v624, 0.5
  %v641 = vmul.f32 %v625, 0.5
  %v642 = vmul.f32 %v626, 0.5
  %v643 = vmul.f32 %v627, 0.5
  %v644 = vmul.f32 %v628, 0.5
  %v645 = vmul.f32 %v629, 0.5
  %v646 = vmul.f32 %v630, 0.5
  %v647 = vmul.f32 %v631, 0.5
  %v648 = vmul.f32 %v632, 0.5
  %v649 = vmul.f32 %v633, 0.5
  %v650 = vadd.f32 %v634, 0.5
  %v651 = vadd.f32 %v635, 0.5
  %v652 = vadd.f32 %v636, 0.5
  %v653 = vadd.f32 %v637, 0.5
  %v654 = vadd.f32 %v638, 0.5
  %v655 = vadd.f32 %v639, 0.5
  %v656 = vadd.f32 %v640, 0.5
  %v657 = vadd.f32 %v641, 0.5
  %v658 = vadd.f32 %v642, 0.5
  %v659 = vadd.f32 %v643, 0.5
  %v660 = vadd.f32 %v644, 0.5
  %v661 = vadd.f32 %v645, 0.5
  %v662 = vadd.f32 %v646, 0.5
  %v663 = vadd.f32 %v647, 0.5
  %v664 = vadd.f32 %v648, 0.5
  %v665 = vadd.f32 %v649, 0.5
  %v666 = vld [vmem:[%s2] sm:$0xff]
  %v667 = vld [vmem:[%s2 + $0x8] sm:$0xff]
  %v668 = vld [vmem:[%s2 + $0x10] sm:$0xff]
  %v669 = vld [vmem:[%s2 + $0x18] sm:$0xff]
  %v670 = vld [vmem:[%s2 + $0x20] sm:$0xff]
  %v671 = vld [vmem:[%s2 + $0x28] sm:$0xff]
  %v672 = vld [vmem:[%s2 + $0x30] sm:$0xff]
  %v673 = vld [vmem:[%s2 + $0x38] sm:$0xff]
  %v674 = vld [vmem:[%s2 + $0x40] sm:$0xff]
  %v675 = vld [vmem:[%s2 + $0x48] sm:$0xff]
  %v676 = vld [vmem:[%s2 + $0x50] sm:$0xff]
  %v677 = vld [vmem:[%s2 + $0x58] sm:$0xff]
  %v678 = vld [vmem:[%s2 + $0x60] sm:$0xff]
  %v679 = vld [vmem:[%s2 + $0x68] sm:$0xff]
  %v680 = vld [vmem:[%s2 + $0x70] sm:$0xff]
  %v681 = vld [vmem:[%s2 + $0x78] sm:$0xff]
  %698 = vrot.lane.b32.xlu0 %v666, 64
  %v699 = vpop.permute.xlu0 %698
  %700 = vrot.lane.b32.xlu0 %v667, 64
  %v701 = vpop.permute.xlu0 %700
  %702 = vrot.lane.b32.xlu0 %v668, 64
  %v703 = vpop.permute.xlu0 %702
  %704 = vrot.lane.b32.xlu0 %v669, 64
  %v705 = vpop.permute.xlu0 %704
  %706 = vrot.lane.b32.xlu0 %v670, 64
  %v707 = vpop.permute.xlu0 %706
  %708 = vrot.lane.b32.xlu0 %v671, 64
  %v709 = vpop.permute.xlu0 %708
  %710 = vrot.lane.b32.xlu0 %v672, 64
  %v711 = vpop.permute.xlu0 %710
  %712 = vrot.lane.b32.xlu0 %v673, 64
  %v713 = vpop.permute.xlu0 %712
  %714 = vrot.lane.b32.xlu0 %v674, 64
  %v715 = vpop.permute.xlu0 %714
  %716 = vrot.lane.b32.xlu0 %v675, 64
  %v717 = vpop.permute.xlu0 %716
  %718 = vrot.lane.b32.xlu0 %v676, 64
  %v719 = vpop.permute.xlu0 %718
  %720 = vrot.lane.b32.xlu0 %v677, 64
  %v721 = vpop.permute.xlu0 %720
  %722 = vrot.lane.b32.xlu0 %v678, 64
  %v723 = vpop.permute.xlu0 %722
  %724 = vrot.lane.b32.xlu0 %v679, 64
  %v725 = vpop.permute.xlu0 %724
  %726 = vrot.lane.b32.xlu0 %v680, 64
  %v727 = vpop.permute.xlu0 %726
  %728 = vrot.lane.b32.xlu0 %v681, 64
  %v729 = vpop.permute.xlu0 %728
  %v746 = vmul.f32 %v650, %v699
  %v747 = vmul.f32 %v651, %v701
  %v748 = vmul.f32 %v652, %v703
  %v749 = vmul.f32 %v653, %v705
  %v750 = vmul.f32 %v654, %v707
  %v751 = vmul.f32 %v655, %v709
  %v752 = vmul.f32 %v656, %v711
  %v753 = vmul.f32 %v657, %v713
  %v754 = vmul.f32 %v658, %v715
  %v755 = vmul.f32 %v659, %v717
  %v756 = vmul.f32 %v660, %v719
  %v757 = vmul.f32 %v661, %v721
  %v758 = vmul.f32 %v662, %v723
  %v759 = vmul.f32 %v663, %v725
  %v760 = vmul.f32 %v664, %v727
  %v761 = vmul.f32 %v665, %v729
  %778 = vrot.lane.b32.xlu0 %v618, 32
  %v779 = vpop.permute.xlu0 %778
  %780 = vrot.lane.b32.xlu0 %v619, 32
  %v781 = vpop.permute.xlu0 %780
  %782 = vrot.lane.b32.xlu0 %v620, 32
  %v783 = vpop.permute.xlu0 %782
  %784 = vrot.lane.b32.xlu0 %v621, 32
  %v785 = vpop.permute.xlu0 %784
  %786 = vrot.lane.b32.xlu0 %v622, 32
  %v787 = vpop.permute.xlu0 %786
  %788 = vrot.lane.b32.xlu0 %v623, 32
  %v789 = vpop.permute.xlu0 %788
  %790 = vrot.lane.b32.xlu0 %v624, 32
  %v791 = vpop.permute.xlu0 %790
  %792 = vrot.lane.b32.xlu0 %v625, 32
  %v793 = vpop.permute.xlu0 %792
  %794 = vrot.lane.b32.xlu0 %v626, 32
  %v795 = vpop.permute.xlu0 %794
  %796 = vrot.lane.b32.xlu0 %v627, 32
  %v797 = vpop.permute.xlu0 %796
  %798 = vrot.lane.b32.xlu0 %v628, 32
  %v799 = vpop.permute.xlu0 %798
  %800 = vrot.lane.b32.xlu0 %v629, 32
  %v801 = vpop.permute.xlu0 %800
  %802 = vrot.lane.b32.xlu0 %v630, 32
  %v803 = vpop.permute.xlu0 %802
  %804 = vrot.lane.b32.xlu0 %v631, 32
  %v805 = vpop.permute.xlu0 %804
  %806 = vrot.lane.b32.xlu0 %v632, 32
  %v807 = vpop.permute.xlu0 %806
  %808 = vrot.lane.b32.xlu0 %v633, 32
  %v809 = vpop.permute.xlu0 %808
  %v826 = vmul.f32 %v650, %v779
  %v827 = vmul.f32 %v651, %v781
  %v828 = vmul.f32 %v652, %v783
  %v829 = vmul.f32 %v653, %v785
  %v830 = vmul.f32 %v654, %v787
  %v831 = vmul.f32 %v655, %v789
  %v832 = vmul.f32 %v656, %v791
  %v833 = vmul.f32 %v657, %v793
  %v834 = vmul.f32 %v658, %v795
  %v835 = vmul.f32 %v659, %v797
  %v836 = vmul.f32 %v660, %v799
  %v837 = vmul.f32 %v661, %v801
  %v838 = vmul.f32 %v662, %v803
  %v839 = vmul.f32 %v663, %v805
  %v840 = vmul.f32 %v664, %v807
  %v841 = vmul.f32 %v665, %v809
  %858 = vrot.lane.b32.xlu0 %v826, 32
  %v859 = vpop.permute.xlu0 %858
  %860 = vrot.lane.b32.xlu0 %v827, 32
  %v861 = vpop.permute.xlu0 %860
  %862 = vrot.lane.b32.xlu0 %v828, 32
  %v863 = vpop.permute.xlu0 %862
  %864 = vrot.lane.b32.xlu0 %v829, 32
  %v865 = vpop.permute.xlu0 %864
  %866 = vrot.lane.b32.xlu0 %v830, 32
  %v867 = vpop.permute.xlu0 %866
  %868 = vrot.lane.b32.xlu0 %v831, 32
  %v869 = vpop.permute.xlu0 %868
  %870 = vrot.lane.b32.xlu0 %v832, 32
  %v871 = vpop.permute.xlu0 %870
  %872 = vrot.lane.b32.xlu0 %v833, 32
  %v873 = vpop.permute.xlu0 %872
  %874 = vrot.lane.b32.xlu0 %v834, 32
  %v875 = vpop.permute.xlu0 %874
  %876 = vrot.lane.b32.xlu0 %v835, 32
  %v877 = vpop.permute.xlu0 %876
  %878 = vrot.lane.b32.xlu0 %v836, 32
  %v879 = vpop.permute.xlu0 %878
  %880 = vrot.lane.b32.xlu0 %v837, 32
  %v881 = vpop.permute.xlu0 %880
  %882 = vrot.lane.b32.xlu0 %v838, 32
  %v883 = vpop.permute.xlu0 %882
  %884 = vrot.lane.b32.xlu0 %v839, 32
  %v885 = vpop.permute.xlu0 %884
  %886 = vrot.lane.b32.xlu0 %v840, 32
  %v887 = vpop.permute.xlu0 %886
  %888 = vrot.lane.b32.xlu0 %v841, 32
  %v889 = vpop.permute.xlu0 %888
  %v906 = vadd.f32 %v746, %v859
  %v907 = vadd.f32 %v747, %v861
  %v908 = vadd.f32 %v748, %v863
  %v909 = vadd.f32 %v749, %v865
  %v910 = vadd.f32 %v750, %v867
  %v911 = vadd.f32 %v751, %v869
  %v912 = vadd.f32 %v752, %v871
  %v913 = vadd.f32 %v753, %v873
  %v914 = vadd.f32 %v754, %v875
  %v915 = vadd.f32 %v755, %v877
  %v916 = vadd.f32 %v756, %v879
  %v917 = vadd.f32 %v757, %v881
  %v918 = vadd.f32 %v758, %v883
  %v919 = vadd.f32 %v759, %v885
  %v920 = vadd.f32 %v760, %v887
  %v921 = vadd.f32 %v761, %v889
  %v922 = vtanh.pop %v906
  %v923 = vtanh.pop %v907
  %v924 = vtanh.pop %v908
  %v925 = vtanh.pop %v909
  %v926 = vtanh.pop %v910
  %v927 = vtanh.pop %v911
  %v928 = vtanh.pop %v912
  %v929 = vtanh.pop %v913
  %v930 = vtanh.pop %v914
  %v931 = vtanh.pop %v915
  %v932 = vtanh.pop %v916
  %v933 = vtanh.pop %v917
  %v934 = vtanh.pop %v918
  %v935 = vtanh.pop %v919
  %v936 = vtanh.pop %v920
  %v937 = vtanh.pop %v921
  %954 = vrot.lane.b32.xlu0 %v922, 32
  %v955 = vpop.permute.xlu0 %954
  %956 = vrot.lane.b32.xlu0 %v923, 32
  %v957 = vpop.permute.xlu0 %956
  %958 = vrot.lane.b32.xlu0 %v924, 32
  %v959 = vpop.permute.xlu0 %958
  %960 = vrot.lane.b32.xlu0 %v925, 32
  %v961 = vpop.permute.xlu0 %960
  %962 = vrot.lane.b32.xlu0 %v926, 32
  %v963 = vpop.permute.xlu0 %962
  %964 = vrot.lane.b32.xlu0 %v927, 32
  %v965 = vpop.permute.xlu0 %964
  %966 = vrot.lane.b32.xlu0 %v928, 32
  %v967 = vpop.permute.xlu0 %966
  %968 = vrot.lane.b32.xlu0 %v929, 32
  %v969 = vpop.permute.xlu0 %968
  %970 = vrot.lane.b32.xlu0 %v930, 32
  %v971 = vpop.permute.xlu0 %970
  %972 = vrot.lane.b32.xlu0 %v931, 32
  %v973 = vpop.permute.xlu0 %972
  %974 = vrot.lane.b32.xlu0 %v932, 32
  %v975 = vpop.permute.xlu0 %974
  %976 = vrot.lane.b32.xlu0 %v933, 32
  %v977 = vpop.permute.xlu0 %976
  %978 = vrot.lane.b32.xlu0 %v934, 32
  %v979 = vpop.permute.xlu0 %978
  %980 = vrot.lane.b32.xlu0 %v935, 32
  %v981 = vpop.permute.xlu0 %980
  %982 = vrot.lane.b32.xlu0 %v936, 32
  %v983 = vpop.permute.xlu0 %982
  %984 = vrot.lane.b32.xlu0 %v937, 32
  %v985 = vpop.permute.xlu0 %984
  %v1002 = vmul.f32 %v650, %v955
  %v1003 = vmul.f32 %v651, %v957
  %v1004 = vmul.f32 %v652, %v959
  %v1005 = vmul.f32 %v653, %v961
  %v1006 = vmul.f32 %v654, %v963
  %v1007 = vmul.f32 %v655, %v965
  %v1008 = vmul.f32 %v656, %v967
  %v1009 = vmul.f32 %v657, %v969
  %v1010 = vmul.f32 %v658, %v971
  %v1011 = vmul.f32 %v659, %v973
  %v1012 = vmul.f32 %v660, %v975
  %v1013 = vmul.f32 %v661, %v977
  %v1014 = vmul.f32 %v662, %v979
  %v1015 = vmul.f32 %v663, %v981
  %v1016 = vmul.f32 %v664, %v983
  %v1017 = vmul.f32 %v665, %v985
  %1034 = vrot.lane.b32.xlu0 %v1002, 32
  %v1035 = vpop.permute.xlu0 %1034
  %1036 = vrot.lane.b32.xlu0 %v1003, 32
  %v1037 = vpop.permute.xlu0 %1036
  %1038 = vrot.lane.b32.xlu0 %v1004, 32
  %v1039 = vpop.permute.xlu0 %1038
  %1040 = vrot.lane.b32.xlu0 %v1005, 32
  %v1041 = vpop.permute.xlu0 %1040
  %1042 = vrot.lane.b32.xlu0 %v1006, 32
  %v1043 = vpop.permute.xlu0 %1042
  %1044 = vrot.lane.b32.xlu0 %v1007, 32
  %v1045 = vpop.permute.xlu0 %1044
  %1046 = vrot.lane.b32.xlu0 %v1008, 32
  %v1047 = vpop.permute.xlu0 %1046
  %1048 = vrot.lane.b32.xlu0 %v1009, 32
  %v1049 = vpop.permute.xlu0 %1048
  %1050 = vrot.lane.b32.xlu0 %v1010, 32
  %v1051 = vpop.permute.xlu0 %1050
  %1052 = vrot.lane.b32.xlu0 %v1011, 32
  %v1053 = vpop.permute.xlu0 %1052
  %1054 = vrot.lane.b32.xlu0 %v1012, 32
  %v1055 = vpop.permute.xlu0 %1054
  %1056 = vrot.lane.b32.xlu0 %v1013, 32
  %v1057 = vpop.permute.xlu0 %1056
  %1058 = vrot.lane.b32.xlu0 %v1014, 32
  %v1059 = vpop.permute.xlu0 %1058
  %1060 = vrot.lane.b32.xlu0 %v1015, 32
  %v1061 = vpop.permute.xlu0 %1060
  %1062 = vrot.lane.b32.xlu0 %v1016, 32
  %v1063 = vpop.permute.xlu0 %1062
  %1064 = vrot.lane.b32.xlu0 %v1017, 32
  %v1065 = vpop.permute.xlu0 %1064
  %1098 = vrot.lane.b32.xlu0 %v906, 96
  %v1099 = vpop.permute.xlu0 %1098
  %1100 = vrot.lane.b32.xlu0 %v907, 96
  %v1101 = vpop.permute.xlu0 %1100
  %1102 = vrot.lane.b32.xlu0 %v908, 96
  %v1103 = vpop.permute.xlu0 %1102
  %1104 = vrot.lane.b32.xlu0 %v909, 96
  %v1105 = vpop.permute.xlu0 %1104
  %1106 = vrot.lane.b32.xlu0 %v910, 96
  %v1107 = vpop.permute.xlu0 %1106
  %1108 = vrot.lane.b32.xlu0 %v911, 96
  %v1109 = vpop.permute.xlu0 %1108
  %1110 = vrot.lane.b32.xlu0 %v912, 96
  %v1111 = vpop.permute.xlu0 %1110
  %1112 = vrot.lane.b32.xlu0 %v913, 96
  %v1113 = vpop.permute.xlu0 %1112
  %1114 = vrot.lane.b32.xlu0 %v914, 96
  %v1115 = vpop.permute.xlu0 %1114
  %1116 = vrot.lane.b32.xlu0 %v915, 96
  %v1117 = vpop.permute.xlu0 %1116
  %1118 = vrot.lane.b32.xlu0 %v916, 96
  %v1119 = vpop.permute.xlu0 %1118
  %1120 = vrot.lane.b32.xlu0 %v917, 96
  %v1121 = vpop.permute.xlu0 %1120
  %1122 = vrot.lane.b32.xlu0 %v918, 96
  %v1123 = vpop.permute.xlu0 %1122
  %1124 = vrot.lane.b32.xlu0 %v919, 96
  %v1125 = vpop.permute.xlu0 %1124
  %1126 = vrot.lane.b32.xlu0 %v920, 96
  %v1127 = vpop.permute.xlu0 %1126
  %1128 = vrot.lane.b32.xlu0 %v921, 96
  %v1129 = vpop.permute.xlu0 %1128
  %v1146 = vsel %vm208, %v1035, %v1099
  %v1147 = vsel %vm208, %v1037, %v1101
  %v1148 = vsel %vm208, %v1039, %v1103
  %v1149 = vsel %vm208, %v1041, %v1105
  %v1150 = vsel %vm208, %v1043, %v1107
  %v1151 = vsel %vm208, %v1045, %v1109
  %v1152 = vsel %vm208, %v1047, %v1111
  %v1153 = vsel %vm208, %v1049, %v1113
  %v1154 = vsel %vm208, %v1051, %v1115
  %v1155 = vsel %vm208, %v1053, %v1117
  %v1156 = vsel %vm208, %v1055, %v1119
  %v1157 = vsel %vm208, %v1057, %v1121
  %v1158 = vsel %vm208, %v1059, %v1123
  %v1159 = vsel %vm208, %v1061, %v1125
  %v1160 = vsel %vm208, %v1063, %v1127
  %v1161 = vsel %vm208, %v1065, %v1129
  %vm1162 = vcmask 523264
  %1163 = vst.msk [vmem:[%s6] sm:$0xff] %vm1162, %v1146
  %1164 = vst.msk [vmem:[%s6 + $0x8] sm:$0xff] %vm1162, %v1147
  %1165 = vst.msk [vmem:[%s6 + $0x10] sm:$0xff] %vm1162, %v1148
  %1166 = vst.msk [vmem:[%s6 + $0x18] sm:$0xff] %vm1162, %v1149
  %1167 = vst.msk [vmem:[%s6 + $0x20] sm:$0xff] %vm1162, %v1150
  %1168 = vst.msk [vmem:[%s6 + $0x28] sm:$0xff] %vm1162, %v1151
  %1169 = vst.msk [vmem:[%s6 + $0x30] sm:$0xff] %vm1162, %v1152
  %1170 = vst.msk [vmem:[%s6 + $0x38] sm:$0xff] %vm1162, %v1153
  %1171 = vst.msk [vmem:[%s6 + $0x40] sm:$0xff] %vm1162, %v1154
  %1172 = vst.msk [vmem:[%s6 + $0x48] sm:$0xff] %vm1162, %v1155
  %1173 = vst.msk [vmem:[%s6 + $0x50] sm:$0xff] %vm1162, %v1156
  %1174 = vst.msk [vmem:[%s6 + $0x58] sm:$0xff] %vm1162, %v1157
  %1175 = vst.msk [vmem:[%s6 + $0x60] sm:$0xff] %vm1162, %v1158
  %1176 = vst.msk [vmem:[%s6 + $0x68] sm:$0xff] %vm1162, %v1159
  %1177 = vst.msk [vmem:[%s6 + $0x70] sm:$0xff] %vm1162, %v1160
  %1178 = vst.msk [vmem:[%s6 + $0x78] sm:$0xff] %vm1162, %v1161
  // Predicated region
  $region26: #{node_conv.1} parent=0 // pred_check
    _
  $region27: #{node_conv.1} parent=0 // pred_check_branch
    %1180 = sbr.rel (0) target = $region29
  $region28: #{node_conv.1} parent=0 // pred_region
    _
  $region29: #{node_conv.1} parent=0 // pred_fallthru
    _
  // Predicated region
  $region30: #{node_conv.1} parent=0 // pred_check
    _
  $region31: #{node_conv.1} parent=0 // pred_check_branch
    %1182 = sbr.rel (0) target = $region33
  $region32: #{node_conv.1} parent=0 // pred_region
    _
  $region33: #{node_conv.1} parent=0 // pred_fallthru
    _

</llo_original>
